<compile_context>
chip_gen: v7x
topology: tpu7x:2x2x1
jax: 0.10.0
libtpu: 0.0.40
codegen_flags: <defaults>
</compile_context>

<pallas_src>
import functools

import jax
import jax.numpy as jnp
from jax.experimental import pallas as pl
from jax.experimental.pallas import tpu as pltpu


_LANES = 128          # lane-dense output width (also pads both heads' classes)
_NEG = -1e30          # effective -inf for masked-out logit columns


# ------------------------------ tiling plan -------------------------------- #
def _round_down8(x):
    return max(8, (int(x) // 8) * 8)


def _tiling_plan(batch, seq, hidden, emb_itemsize, cp, max_tile=256):
    """Pick (batch_tile, vmem_limit_bytes) for this chip generation.

    * batch_tile fits triple-buffered embedding tiles plus the kernel's f32
      pooling intermediates in ~2/3 of physical VMEM (64 MiB on v7x,
      128 MiB on v5e/v6e) — TB is re-derived per generation instead of
      clamping the VMEM limit below what the kernel needs.
    * For batch > 8 the tile is capped at round_up(ceil(B/2), 8) so the grid
      has >= 2 steps and "parallel" can shard them across v7x's 2 TensorCores.
    * vmem_limit_bytes is set explicitly (v5e's scoped default is only 16 MiB)
      but kept below ~7/8 of physical VMEM.
    """
    try:
        vmem_bytes = int(pltpu.get_tpu_info().vmem_capacity_bytes)
    except Exception:
        vmem_bytes = 64 << 20                      # conservative: v7x-sized VMEM

    resident = 2 * (hidden + 8) * cp * 4           # fused head weights + bias
    per_row = (3 * seq * hidden * emb_itemsize     # Buffered(3) embedding tiles
               + 3 * seq * hidden * 4              # f32 iota/mask/sum intermediates
               + 2 * cp * 4 + 256)                 # output tiles, lens, slack

    if batch <= 8:
        tb = batch                                 # block == full dim is legal
    else:
        budget = (2 * vmem_bytes) // 3
        cap = _round_down8(max(8, (budget - resident) // per_row))
        half = ((-(-batch // 2)) + 7) // 8 * 8     # round_up(ceil(B/2), 8)
        tb = _round_down8(min(max_tile, cap, half))

    est = resident + tb * per_row + (4 << 20)
    vmem_limit = int(max(32 << 20, min(est, (vmem_bytes * 7) // 8)))
    return tb, vmem_limit


def _emb_block_spec(tb, seq, hidden, num_steps):
    """Embedding-stream BlockSpec; triple-buffered when the grid is deep."""
    index_map = lambda i: (i, 0, 0)
    buffered = getattr(pl, "Buffered", None)
    if buffered is not None and num_steps >= 3:
        try:
            # Keep two DMAs in flight while per-step compute is tiny.
            return pl.BlockSpec((tb, seq, hidden), index_map,
                                pipeline_mode=buffered(3))
        except TypeError:
            pass
    return pl.BlockSpec((tb, seq, hidden), index_map)


# ------------------------------ Pallas kernel ------------------------------ #
def _make_kernel(c_a: int, c_b: int, cp: int):
    """Fused masked-mean-pool + dual classification head + softmax + argmax."""

    def kernel(emb_ref, lens_ref, w_ref, b_ref, out_ref):
        # emb_ref:  (TB, S, H)  token embeddings, native dtype (bf16/f32)
        # lens_ref: (TB, 1)     int32 valid-token counts (prefix-contiguous mask)
        # w_ref:    (H, CP)     f32 fused head weights [W_A | W_B | 0]
        # b_ref:    (1, CP)     f32 fused head bias    [b_A | b_B | 0]
        # out_ref:  (TB, CP)    f32 packed output slab
        tb, seq, hidden = emb_ref.shape

        # ---- masked mean pooling on the VPU (f32; hidden under the HBM stream)
        emb = emb_ref[...].astype(jnp.float32)      # upcast in vregs; HBM stays bf16
        lens = lens_ref[...]                        # (TB, 1) int32
        s_idx = jax.lax.broadcasted_iota(jnp.int32, (tb, seq, hidden), 1)
        masked = jnp.where(s_idx < lens[:, :, None], emb, 0.0)
        summed = jnp.sum(masked, axis=1)            # (TB, H) f32, VALU accumulate
        denom = jnp.maximum(lens.astype(jnp.float32), 1e-9)
        pooled = summed / denom                     # exact division (per review)

        # ---- both classification heads in one MXU matmul ----
        logits = (jnp.dot(pooled, w_ref[...],
                          preferred_element_type=jnp.float32)
                  + b_ref[...])                     # (TB, CP)

        col = jax.lax.broadcasted_iota(jnp.int32, logits.shape, 1)

        def head(valid):
            l = jnp.where(valid, logits, _NEG)
            m = jnp.max(l, axis=-1, keepdims=True)
            # first-occurrence argmax on logits (== argmax of softmax probs)
            pred = jnp.min(jnp.where(l >= m, col, cp), axis=-1, keepdims=True)
            e = jnp.where(valid, jnp.exp(l - m), 0.0)
            p = e / jnp.sum(e, axis=-1, keepdims=True)   # exact: probs sum to 1
            return p, pred

        probs_a, pred_a = head(col < c_a)
        probs_b, pred_b = head((col >= c_a) & (col < c_a + c_b))
        pred_b = pred_b - c_a                       # back to task-B class index

        # ---- pack one lane-dense (TB, CP) f32 slab (no masked vst) ----
        slab = probs_a + probs_b                    # disjoint column support
        slab = jnp.where(col == cp - 2, pred_a.astype(jnp.float32), slab)
        slab = jnp.where(col == cp - 1, pred_b.astype(jnp.float32), slab)
        out_ref[...] = slab

    return kernel


# --------------------------------- wrapper --------------------------------- #
@functools.partial(jax.jit,
                   static_argnames=("c_a", "c_b", "batch_tile", "vmem_limit"))
def fused_multitask_heads(token_embeddings, attention_mask, w_fused, b_fused,
                          *, c_a, c_b, batch_tile, vmem_limit):
    """One HBM pass: mean-pool + both heads + softmax + argmax.

    token_embeddings: (B, S, H) float (bf16 recommended — streamed as-is)
    attention_mask:   (B, S)   0/1 padding mask (prefix-contiguous, from tokenizer)
    w_fused:          (H, 128) f32, cols [0,c_a)=W_A, [c_a,c_a+c_b)=W_B, rest 0
    b_fused:          (1, 128) f32, same column layout
    returns: probs_A (B,c_a) f32, preds_A (B,) i32, probs_B (B,c_b) f32, preds_B (B,) i32
    """
    B, S, H = token_embeddings.shape
    CP = w_fused.shape[1]
    assert c_a + c_b <= CP - 2, "both heads + 2 pred lanes must fit 128 lanes"

    # The tokenizer's padding mask is prefix-contiguous, so per-row token counts
    # fully determine it; shipping (B, 1) int32 counts instead of a (B, 1, S) f32
    # mask removes one DMA stream and gives an exact pooling denominator.
    lens = jnp.sum(attention_mask.astype(jnp.int32), axis=1).reshape(B, 1)

    TB = batch_tile
    num_steps = pl.cdiv(B, TB)
    grid = (num_steps,)

    out = pl.pallas_call(
        _make_kernel(c_a, c_b, CP),
        out_shape=jax.ShapeDtypeStruct((B, CP), jnp.float32),
        grid_spec=pltpu.PrefetchScalarGridSpec(
            num_scalar_prefetch=0,
            grid=grid,
            in_specs=[
                _emb_block_spec(TB, S, H, num_steps),        # token embeddings
                pl.BlockSpec((TB, 1), lambda i: (i, 0)),     # token counts
                pl.BlockSpec((H, CP), lambda i: (0, 0)),     # fused head weights
                pl.BlockSpec((1, CP), lambda i: (0, 0)),     # fused head bias
            ],
            out_specs=pl.BlockSpec((TB, CP), lambda i: (i, 0)),
        ),
        compiler_params=pltpu.CompilerParams(
            dimension_semantics=("parallel",),   # shards grid steps over v7x's 2 TCs
            vmem_limit_bytes=vmem_limit,
        ),
    )(token_embeddings, lens, w_fused, b_fused)

    probs_a = out[:, :c_a]
    probs_b = out[:, c_a:c_a + c_b]
    preds_a = out[:, CP - 2].astype(jnp.int32)   # small ints, exact in f32
    preds_b = out[:, CP - 1].astype(jnp.int32)
    return probs_a, preds_a, probs_b, preds_b


# ----------------------- module-level wrapper (glue) ----------------------- #
class MultiTaskSentenceTransformerPallas:
    # TODO(synk): HuggingFace tokenizer + pretrained MiniLM transformer have no
    # Pallas equivalent; token_embeddings / attention_mask are taken as inputs.

    def __init__(self, hidden_size=32, num_classes_A=3, num_classes_B=3, seed=0):
        k = jax.random.PRNGKey(seed)
        kwa, kba, kwb, kbb = jax.random.split(k, 4)
        bound = 1.0 / float(hidden_size) ** 0.5
        # nn.Linear(hidden, C) stores weight (C, H); we keep W as (H, C)
        # (pre-transposed) so the kernel computes pooled @ W + b.
        self.W_A = jax.random.uniform(kwa, (hidden_size, num_classes_A),
                                      minval=-bound, maxval=bound, dtype=jnp.float32)
        self.b_A = jax.random.uniform(kba, (num_classes_A,),
                                      minval=-bound, maxval=bound, dtype=jnp.float32)
        self.W_B = jax.random.uniform(kwb, (hidden_size, num_classes_B),
                                      minval=-bound, maxval=bound, dtype=jnp.float32)
        self.b_B = jax.random.uniform(kbb, (num_classes_B,),
                                      minval=-bound, maxval=bound, dtype=jnp.float32)
        self.sentence_classification_labels = {0: 'class_1', 1: 'class_2', 2: 'class_3'}
        self.sentiment_labels = {0: 'negative', 1: 'neutral', 2: 'positive'}
        self.hidden_size = hidden_size
        self.c_a, self.c_b = num_classes_A, num_classes_B

        # Fused lane-dense head params: [W_A | W_B | zero pad] -> (H, 128).
        w = jnp.zeros((hidden_size, _LANES), jnp.float32)
        w = w.at[:, :self.c_a].set(self.W_A)
        w = w.at[:, self.c_a:self.c_a + self.c_b].set(self.W_B)
        b = jnp.zeros((1, _LANES), jnp.float32)
        b = b.at[0, :self.c_a].set(self.b_A)
        b = b.at[0, self.c_a:self.c_a + self.c_b].set(self.b_B)
        self.w_fused, self.b_fused = w, b

    def _run(self, token_embeddings, attention_mask):
        B, S, H = token_embeddings.shape
        eb = jnp.dtype(token_embeddings.dtype).itemsize
        tb, vmem_limit = _tiling_plan(B, S, H, eb, _LANES)
        return fused_multitask_heads(
            token_embeddings, attention_mask, self.w_fused, self.b_fused,
            c_a=self.c_a, c_b=self.c_b, batch_tile=tb, vmem_limit=vmem_limit)

    def forward(self, token_embeddings, attention_mask, task='A'):
        """Single-task API matching the PyTorch module: (labels, probs)."""
        probs_a, preds_a, probs_b, preds_b = self._run(token_embeddings, attention_mask)
        if task == 'A':
            probs, preds, label_map = probs_a, preds_a, self.sentence_classification_labels
        elif task == 'B':
            probs, preds, label_map = probs_b, preds_b, self.sentiment_labels
        else:
            raise ValueError(f'Unknown task: {task}')
        labels = [label_map[int(i)] for i in jax.device_get(preds)]
        return labels, probs

    def forward_both(self, token_embeddings, attention_mask):
        """Both tasks from a single HBM pass over the embeddings."""
        probs_a, preds_a, probs_b, preds_b = self._run(token_embeddings, attention_mask)
        labels_a = [self.sentence_classification_labels[int(i)]
                    for i in jax.device_get(preds_a)]
        labels_b = [self.sentiment_labels[int(i)]
                    for i in jax.device_get(preds_b)]
        return (labels_a, probs_a), (labels_b, probs_b)


# ----------------------------------- main ----------------------------------- #
if __name__ == "__main__":
    B, S, H = 3, 8, 32   # 3 "sentences", seq len 8, hidden 32

    key = jax.random.PRNGKey(0)
    k_emb, k_emb2, k_len2 = jax.random.split(key, 3)
    # Synthetic transformer output (stand-in for model_output[0]); kept bf16 so
    # the kernel streams half the HBM bytes and upcasts in vregs.
    token_embeddings = jax.random.normal(
        k_emb, (B, S, H), dtype=jnp.float32).astype(jnp.bfloat16)
    # Padding mask: sentence lengths 8, 5, 6.
    lengths = jnp.array([8, 5, 6], dtype=jnp.int32)
    attention_mask = (jnp.arange(S)[None, :] < lengths[:, None]).astype(jnp.float32)

    model = MultiTaskSentenceTransformerPallas(hidden_size=H)

    # Fused path: both tasks, one pass over the embeddings.
    (labels_A, probs_A), (labels_B, probs_B) = model.forward_both(
        token_embeddings, attention_mask)
    jax.block_until_ready((probs_A, probs_B))

    # Single-task API (same fused kernel underneath).
    labels_A2, probs_A2 = model.forward(token_embeddings, attention_mask, task='A')

    # ---- reference check in plain JAX (same math, f32) ----
    emb32 = token_embeddings.astype(jnp.float32)
    mask_e = attention_mask[:, :, None]
    pooled = (emb32 * mask_e).sum(1) / jnp.maximum(mask_e.sum(1), 1e-9)
    ref_logits_A = pooled @ model.W_A + model.b_A
    ref_logits_B = pooled @ model.W_B + model.b_B
    ref_probs_A = jax.nn.softmax(ref_logits_A, axis=-1)
    ref_probs_B = jax.nn.softmax(ref_logits_B, axis=-1)

    assert probs_A.shape == (B, 3) and probs_B.shape == (B, 3)
    assert jnp.allclose(probs_A, ref_probs_A, atol=5e-3), "task A probs mismatch"
    assert jnp.allclose(probs_B, ref_probs_B, atol=5e-3), "task B probs mismatch"
    assert jnp.allclose(probs_A2, probs_A), "single-task path mismatch"
    # exact softmax division -> rows sum to 1
    assert jnp.allclose(probs_A.sum(-1), 1.0, atol=1e-5)
    assert jnp.allclose(probs_B.sum(-1), 1.0, atol=1e-5)

    exp_labels_A = [model.sentence_classification_labels[int(i)]
                    for i in jnp.argmax(ref_logits_A, axis=-1)]
    exp_labels_B = [model.sentiment_labels[int(i)]
                    for i in jnp.argmax(ref_logits_B, axis=-1)]
    assert labels_A == exp_labels_A and labels_A2 == exp_labels_A, "task A labels mismatch"
    assert labels_B == exp_labels_B, "task B labels mismatch"
    assert len(labels_A) == B and len(labels_B) == B

    # ---- second check: multi-step grid + partial last batch tile (B=20) ----
    B2 = 20
    emb2 = jax.random.normal(k_emb2, (B2, S, H), dtype=jnp.float32).astype(jnp.bfloat16)
    len2 = jax.random.randint(k_len2, (B2,), 1, S + 1)
    mask2 = (jnp.arange(S)[None, :] < len2[:, None]).astype(jnp.float32)

    pa2, preda2, pb2, predb2 = model._run(emb2, mask2)
    jax.block_until_ready((pa2, pb2))

    emb2_32 = emb2.astype(jnp.float32)
    m2e = mask2[:, :, None]
    pooled2 = (emb2_32 * m2e).sum(1) / jnp.maximum(m2e.sum(1), 1e-9)
    ref_pa2 = jax.nn.softmax(pooled2 @ model.W_A + model.b_A, axis=-1)
    ref_pb2 = jax.nn.softmax(pooled2 @ model.W_B + model.b_B, axis=-1)

    assert pa2.shape == (B2, 3) and pb2.shape == (B2, 3)
    assert jnp.allclose(pa2, ref_pa2, atol=5e-3), "batched task A probs mismatch"
    assert jnp.allclose(pb2, ref_pb2, atol=5e-3), "batched task B probs mismatch"
    assert bool(jnp.all(preda2 == jnp.argmax(pa2, axis=-1))), "task A preds mismatch"
    assert bool(jnp.all(predb2 == jnp.argmax(pb2, axis=-1))), "task B preds mismatch"

    print("KERNEL_OK")
</pallas_src>

<mosaic_0001>
module attributes {stable_mosaic.version = 11 : i64} {
  func.func @kernel(%arg0: i32, %arg1: memref<3x8x32xbf16, #tpu.memory_space<vmem>>, %arg2: memref<3x1xi32, #tpu.memory_space<vmem>>, %arg3: memref<32x128xf32, #tpu.memory_space<vmem>>, %arg4: memref<1x128xf32, #tpu.memory_space<vmem>>, %arg5: memref<3x128xf32, #tpu.memory_space<vmem>>) attributes {dimension_semantics = [#tpu.dimension_semantics<parallel>], iteration_bounds = array<i64: 1>, scalar_prefetch = 0 : i64, scratch_operands = 0 : i64, tpu.core_type = #tpu.core_type<tc>, window_params = [{transform_indices = @transform_0, window_bounds = array<i64: 3, 8, 32>}, {transform_indices = @transform_1, window_bounds = array<i64: 3, 1>}, {pipeline_mode = #tpu.pipeline_mode<synchronous>, transform_indices = @transform_2, window_bounds = array<i64: 32, 128>}, {pipeline_mode = #tpu.pipeline_mode<synchronous>, transform_indices = @transform_3, window_bounds = array<i64: 1, 128>}, {transform_indices = @transform_4, window_bounds = array<i64: 3, 128>}]} {
    %c0 = arith.constant 0 : index
    %c0_0 = arith.constant 0 : index
    %c0_1 = arith.constant 0 : index
    %0 = vector.load %arg1[%c0, %c0_0, %c0_1] : memref<3x8x32xbf16, #tpu.memory_space<vmem>>, vector<3x8x32xbf16>
    %1 = arith.extf %0 : vector<3x8x32xbf16> to vector<3x8x32xf32>
    %c0_2 = arith.constant 0 : index
    %c0_3 = arith.constant 0 : index
    %2 = vector.load %arg2[%c0_2, %c0_3] : memref<3x1xi32, #tpu.memory_space<vmem>>, vector<3x1xi32>
    %3 = tpu.iota {dimensions = array<i32: 1>} : vector<3x8x32xi32>
    %4 = vector.shape_cast %2 : vector<3x1xi32> to vector<3x1x1xi32>
    %5 = vector.broadcast %4 : vector<3x1x1xi32> to vector<3x8x32xi32>
    %6 = arith.cmpi slt, %3, %5 : vector<3x8x32xi32>
    %cst = arith.constant 0.000000e+00 : f32
    %7 = vector.broadcast %cst : f32 to vector<3x8x32xf32>
    %8 = arith.select %6, %1, %7 : vector<3x8x32xi1>, vector<3x8x32xf32>
    %cst_4 = arith.constant dense<0.000000e+00> : vector<3x32xf32>
    %9 = vector.multi_reduction <add>, %8, %cst_4 [1] : vector<3x8x32xf32> to vector<3x32xf32>
    %10 = arith.sitofp %2 : vector<3x1xi32> to vector<3x1xf32>
    %cst_5 = arith.constant 9.99999971E-10 : f32
    %11 = vector.broadcast %cst_5 : f32 to vector<3x1xf32>
    %12 = arith.maximumf %10, %11 : vector<3x1xf32>
    %13 = vector.broadcast %12 : vector<3x1xf32> to vector<3x32xf32>
    %14 = arith.divf %9, %13 : vector<3x32xf32>
    %c0_6 = arith.constant 0 : index
    %c0_7 = arith.constant 0 : index
    %15 = vector.load %arg3[%c0_6, %c0_7] : memref<32x128xf32, #tpu.memory_space<vmem>>, vector<32x128xf32>
    %cst_8 = arith.constant dense<0.000000e+00> : vector<3x128xf32>
    %16 = tpu.matmul %14, %15, %cst_8 {dimension_numbers = #tpu.dot_dimension_numbers<[1], [0], [0], [1], [0, 0, 1, 1], [], []>} : vector<3x32xf32>, vector<32x128xf32>, vector<3x128xf32> -> vector<3x128xf32>
    %c0_9 = arith.constant 0 : index
    %c0_10 = arith.constant 0 : index
    %17 = vector.load %arg4[%c0_9, %c0_10] : memref<1x128xf32, #tpu.memory_space<vmem>>, vector<1x128xf32>
    %18 = vector.broadcast %17 : vector<1x128xf32> to vector<3x128xf32>
    %19 = arith.addf %16, %18 : vector<3x128xf32>
    %20 = tpu.iota {dimensions = array<i32: 1>} : vector<3x128xi32>
    %c3_i32 = arith.constant 3 : i32
    %21 = vector.broadcast %c3_i32 : i32 to vector<3x128xi32>
    %22 = arith.cmpi slt, %20, %21 : vector<3x128xi32>
    %cst_11 = arith.constant -1.000000e+30 : f32
    %23 = vector.broadcast %cst_11 : f32 to vector<3x128xf32>
    %24 = arith.select %22, %19, %23 : vector<3x128xi1>, vector<3x128xf32>
    %cst_12 = arith.constant dense<0xFF800000> : vector<3xf32>
    %25 = vector.multi_reduction <maximumf>, %24, %cst_12 [1] : vector<3x128xf32> to vector<3xf32>
    %26 = vector.shape_cast %25 : vector<3xf32> to vector<3x1xf32>
    %27 = vector.broadcast %26 : vector<3x1xf32> to vector<3x128xf32>
    %28 = arith.cmpf oge, %24, %27 : vector<3x128xf32>
    %c128_i32 = arith.constant 128 : i32
    %29 = vector.broadcast %c128_i32 : i32 to vector<3x128xi32>
    %30 = arith.select %28, %20, %29 : vector<3x128xi1>, vector<3x128xi32>
    %cst_13 = arith.constant dense<2147483647> : vector<3xi32>
    %31 = vector.multi_reduction <minsi>, %30, %cst_13 [1] : vector<3x128xi32> to vector<3xi32>
    %32 = vector.shape_cast %31 : vector<3xi32> to vector<3x1xi32>
    %33 = vector.broadcast %26 : vector<3x1xf32> to vector<3x128xf32>
    %34 = arith.subf %24, %33 : vector<3x128xf32>
    %35 = math.exp %34 : vector<3x128xf32>
    %cst_14 = arith.constant 0.000000e+00 : f32
    %36 = vector.broadcast %cst_14 : f32 to vector<3x128xf32>
    %37 = arith.select %22, %35, %36 : vector<3x128xi1>, vector<3x128xf32>
    %cst_15 = arith.constant dense<0.000000e+00> : vector<3xf32>
    %38 = vector.multi_reduction <add>, %37, %cst_15 [1] : vector<3x128xf32> to vector<3xf32>
    %39 = vector.shape_cast %38 : vector<3xf32> to vector<3x1xf32>
    %40 = vector.broadcast %39 : vector<3x1xf32> to vector<3x128xf32>
    %41 = arith.divf %37, %40 : vector<3x128xf32>
    %c3_i32_16 = arith.constant 3 : i32
    %42 = vector.broadcast %c3_i32_16 : i32 to vector<3x128xi32>
    %43 = arith.cmpi sge, %20, %42 : vector<3x128xi32>
    %c6_i32 = arith.constant 6 : i32
    %44 = vector.broadcast %c6_i32 : i32 to vector<3x128xi32>
    %45 = arith.cmpi slt, %20, %44 : vector<3x128xi32>
    %46 = arith.andi %43, %45 : vector<3x128xi1>
    %cst_17 = arith.constant -1.000000e+30 : f32
    %47 = vector.broadcast %cst_17 : f32 to vector<3x128xf32>
    %48 = arith.select %46, %19, %47 : vector<3x128xi1>, vector<3x128xf32>
    %cst_18 = arith.constant dense<0xFF800000> : vector<3xf32>
    %49 = vector.multi_reduction <maximumf>, %48, %cst_18 [1] : vector<3x128xf32> to vector<3xf32>
    %50 = vector.shape_cast %49 : vector<3xf32> to vector<3x1xf32>
    %51 = vector.broadcast %50 : vector<3x1xf32> to vector<3x128xf32>
    %52 = arith.cmpf oge, %48, %51 : vector<3x128xf32>
    %c128_i32_19 = arith.constant 128 : i32
    %53 = vector.broadcast %c128_i32_19 : i32 to vector<3x128xi32>
    %54 = arith.select %52, %20, %53 : vector<3x128xi1>, vector<3x128xi32>
    %cst_20 = arith.constant dense<2147483647> : vector<3xi32>
    %55 = vector.multi_reduction <minsi>, %54, %cst_20 [1] : vector<3x128xi32> to vector<3xi32>
    %56 = vector.shape_cast %55 : vector<3xi32> to vector<3x1xi32>
    %57 = vector.broadcast %50 : vector<3x1xf32> to vector<3x128xf32>
    %58 = arith.subf %48, %57 : vector<3x128xf32>
    %59 = math.exp %58 : vector<3x128xf32>
    %cst_21 = arith.constant 0.000000e+00 : f32
    %60 = vector.broadcast %cst_21 : f32 to vector<3x128xf32>
    %61 = arith.select %46, %59, %60 : vector<3x128xi1>, vector<3x128xf32>
    %cst_22 = arith.constant dense<0.000000e+00> : vector<3xf32>
    %62 = vector.multi_reduction <add>, %61, %cst_22 [1] : vector<3x128xf32> to vector<3xf32>
    %63 = vector.shape_cast %62 : vector<3xf32> to vector<3x1xf32>
    %64 = vector.broadcast %63 : vector<3x1xf32> to vector<3x128xf32>
    %65 = arith.divf %61, %64 : vector<3x128xf32>
    %c3_i32_23 = arith.constant 3 : i32
    %66 = vector.broadcast %c3_i32_23 : i32 to vector<3x1xi32>
    %67 = arith.subi %56, %66 : vector<3x1xi32>
    %68 = arith.addf %41, %65 : vector<3x128xf32>
    %c126_i32 = arith.constant 126 : i32
    %69 = vector.broadcast %c126_i32 : i32 to vector<3x128xi32>
    %70 = arith.cmpi eq, %20, %69 : vector<3x128xi32>
    %71 = arith.sitofp %32 : vector<3x1xi32> to vector<3x1xf32>
    %72 = vector.shape_cast %71 : vector<3x1xf32> to vector<3x1xf32>
    %73 = vector.broadcast %72 : vector<3x1xf32> to vector<3x128xf32>
    %74 = arith.select %70, %73, %68 : vector<3x128xi1>, vector<3x128xf32>
    %c127_i32 = arith.constant 127 : i32
    %75 = vector.broadcast %c127_i32 : i32 to vector<3x128xi32>
    %76 = arith.cmpi eq, %20, %75 : vector<3x128xi32>
    %77 = arith.sitofp %67 : vector<3x1xi32> to vector<3x1xf32>
    %78 = vector.shape_cast %77 : vector<3x1xf32> to vector<3x1xf32>
    %79 = vector.broadcast %78 : vector<3x1xf32> to vector<3x128xf32>
    %80 = arith.select %76, %79, %74 : vector<3x128xi1>, vector<3x128xf32>
    %c0_24 = arith.constant 0 : index
    %c0_25 = arith.constant 0 : index
    %81 = vector.load %arg5[%c0_24, %c0_25] : memref<3x128xf32, #tpu.memory_space<vmem>>, vector<3x128xf32>
    tpu.vector_store %arg5[%c0_24, %c0_25], %80 {strides = array<i32>} : memref<3x128xf32, #tpu.memory_space<vmem>>, vector<3x128xf32>,
    return
  }
  func.func @transform_0(%arg0: i32) -> (i32, i32, i32) {
    %c0_i32 = arith.constant 0 : i32
    %c0_i32_0 = arith.constant 0 : i32
    %c0_i32_1 = arith.constant 0 : i32
    return %arg0, %c0_i32, %c0_i32_0 : i32, i32, i32
  }
  func.func @transform_1(%arg0: i32) -> (i32, i32) {
    %c0_i32 = arith.constant 0 : i32
    %c0_i32_0 = arith.constant 0 : i32
    return %arg0, %c0_i32 : i32, i32
  }
  func.func @transform_2(%arg0: i32) -> (i32, i32) {
    %c0_i32 = arith.constant 0 : i32
    %c0_i32_0 = arith.constant 0 : i32
    %c0_i32_1 = arith.constant 0 : i32
    return %c0_i32, %c0_i32_0 : i32, i32
  }
  func.func @transform_3(%arg0: i32) -> (i32, i32) {
    %c0_i32 = arith.constant 0 : i32
    %c0_i32_0 = arith.constant 0 : i32
    %c0_i32_1 = arith.constant 0 : i32
    return %c0_i32, %c0_i32_0 : i32, i32
  }
  func.func @transform_4(%arg0: i32) -> (i32, i32) {
    %c0_i32 = arith.constant 0 : i32
    %c0_i32_0 = arith.constant 0 : i32
    return %arg0, %c0_i32 : i32, i32
  }
}

</mosaic_0001>

<llo_original>
// kernel: fused_multitask_heads.1
$region0: #{fused_multitask_heads.1}
  #allocation0 [shape = 'u32[]', space=smem, size = 0x4, offset = 0x4, fixed_abs, tag = 'smem constant byte address 0x4 - core index']
  #allocation1 [shape = 'u32[144,128]{1,0:T(1,128)}', space=vmem, size = 0x12000, scoped, tag = 'internal scratch']
  %s0 = inlined_call_operand.vmem [shape: bf16[3,8,32], index: 0, kind: input, shape index: {}]
  %s1 = inlined_call_operand.vmem [shape: s32[3,1], index: 1, kind: input, shape index: {}]
  %s2 = inlined_call_operand.hbm [shape: f32[32,128], index: 2, kind: input, shape index: {}]
  %s3 = inlined_call_operand.vmem [shape: f32[1,128], index: 3, kind: input, shape index: {}]
  %s4 = inlined_call_operand.vmem [shape: f32[3,128], index: 4, kind: output, shape index: {}]
  %s5 = sld [smem:[#allocation0]]
  $region30: #{fused_multitask_heads.1} parent=0
    _
  %s7 = ssub.s32 1, %s5
  %s8 = scalar_select 0, %s7, %s5
  $region1: #{fused_multitask_heads.1} parent=0
    #allocation2 [shape = 'u8[16384]{0}', space=vmem, size = 0x4000, scoped, tag = 'input window, operand 2, single buffered']
    #allocation3 [shape = 's32[1]{0}', space=sflag, size = 0x4, scoped, tag = 'scoped memory for fused_multitask_heads.1']
    %9 = vsyncpa [#allocation3], 0
    // Predicated region
    $region2: #{fused_multitask_heads.1} parent=1 // pred_check
      _
    $region3: #{fused_multitask_heads.1} parent=1 // pred_check_branch
      %11 = sbr.rel (0) target = $region5
    $region4: #{fused_multitask_heads.1} parent=1 // pred_region
      _
    $region5: #{fused_multitask_heads.1} parent=1 // pred_fallthru
      _
    // Predicated region
    $region6: #{fused_multitask_heads.1} parent=1 // pred_check
      _
    $region7: #{fused_multitask_heads.1} parent=1 // pred_check_branch
      %13 = sbr.rel (0) target = $region9
    $region8: #{fused_multitask_heads.1} parent=1 // pred_region
      _
    $region9: #{fused_multitask_heads.1} parent=1 // pred_fallthru
      _
    // Predicated region
    $region10: #{fused_multitask_heads.1} parent=1 // pred_check
      _
    $region11: #{fused_multitask_heads.1} parent=1 // pred_check_branch
      %15 = sbr.rel (0) target = $region13
    $region12: #{fused_multitask_heads.1} parent=1 // pred_region
      %s17 = ssub.s32 512, 512
      %18 = vsyncadd [#allocation3], %s17
      %s19 = sshll.u32 [#allocation2], 4
      %s20 = int_to_ptr.vmem [resolvable:$true] %s19
      %25 = dma.hbm_to_vmem [thread:$0]  %s2, 512, %s20, [#allocation3], 128, 128, 8
    $region13: #{fused_multitask_heads.1} parent=1 // pred_fallthru
      _
    // Predicated region
    $region14: #{fused_multitask_heads.1} parent=1 // pred_check
      _
    $region15: #{fused_multitask_heads.1} parent=1 // pred_check_branch
      %27 = sbr.rel (0) target = $region17
    $region16: #{fused_multitask_heads.1} parent=1 // pred_region
      _
    $region17: #{fused_multitask_heads.1} parent=1 // pred_fallthru
      _
    // Predicated region
    $region18: #{fused_multitask_heads.1} parent=1 // pred_check
      _
    $region19: #{fused_multitask_heads.1} parent=1 // pred_check_branch
      %29 = sbr.rel (0) target = $region21
    $region20: #{fused_multitask_heads.1} parent=1 // pred_region
      %30 = dma.done [#allocation3], 512
    $region21: #{fused_multitask_heads.1} parent=1 // pred_fallthru
      _
    %v31 = vld [vmem:[%s0] sm:$0xf]
    %v32 = vld [vmem:[%s0 + $0x4] sm:$0xf]
    %v33 = vld [vmem:[%s0 + $0x8] sm:$0xf]
    %v34 = vunpack.c.l.bf16 %v31
    %v35 = vunpack.c.l.bf16 %v32
    %v36 = vunpack.c.l.bf16 %v33
    %v37 = vld [vmem:[%s1] sm:$0x7]
    %v38 = vlaneseq
    %v39 = vshrl.u32 %v38, 7
    %v41 = vunpack.c.l.s4 1966171168
    %v42 = vunpack.c.0.s8 %v41
    %v43 = vlaneseq
    %v44 = vshrl.u32 %v43, 7
    %v45 = vsub.s32 %v42, %v44
    %v46 = vrot.slane %v37, %v45
    %v47 = vcombine.high %v46, %v46
    %v49 = vunpack.c.l.s4 1966171168
    %v50 = vunpack.c.0.s8 %v49
    %v51 = vlaneseq
    %v52 = vshrl.u32 %v51, 7
    %v53 = vsub.s32 %v50, %v52
    %v54 = vrot.slane %v46, %v53
    %v56 = vunpack.c.l.s4 1966171168
    %v57 = vunpack.c.0.s8 %v56
    %v58 = vlaneseq
    %v59 = vshrl.u32 %v58, 7
    %v60 = vsub.s32 %v57, %v59
    %v61 = vrot.slane %v47, %v60
    %v62 = vcombine.high %v54, %v54
    %v63 = vlaneseq
    %v64 = vshrl.u32 %v63, 7
    %v65 = vsub.s32 0, %v64
    %v66 = vrot.slane %v54, %v65
    %v67 = vlaneseq
    %v68 = vshrl.u32 %v67, 7
    %v69 = vsub.s32 0, %v68
    %v70 = vrot.slane %v61, %v69
    %v71 = vlaneseq
    %v72 = vshrl.u32 %v71, 7
    %v73 = vsub.s32 0, %v72
    %v74 = vrot.slane %v62, %v73
    %75 = vset.pattern.permute.xlu0 0
    %76 = vperm.xlu0 %75, %v66
    %v77 = vpop.permute.xlu0 %76
    %78 = vset.pattern.permute.xlu0 0
    %79 = vperm.xlu0 %78, %v70
    %v80 = vpop.permute.xlu0 %79
    %81 = vset.pattern.permute.xlu0 0
    %82 = vperm.xlu0 %81, %v74
    %v83 = vpop.permute.xlu0 %82
    %vm84 = vcmp.lt.s32.totalorder %v39, %v77
    %vm85 = vcmp.lt.s32.totalorder %v39, %v80
    %vm86 = vcmp.lt.s32.totalorder %v39, %v83
    %v87 = vsel %vm84, %v34, 0.0
    %v88 = vsel %vm85, %v35, 0.0
    %v89 = vsel %vm86, %v36, 0.0
    %vm90 = vcmask 261120
    %v91 = vsel %vm90, %v87, 0.0
    %v92 = vrot.slane %v91, 4
    %v93 = vadd.f32 %v91, %v92
    %v94 = vrot.slane %v93, 2
    %v95 = vadd.f32 %v93, %v94
    %v96 = vrot.slane %v95, 1
    %v97 = vadd.f32 %v95, %v96
    %v98 = vsel %vm90, %v88, 0.0
    %v99 = vrot.slane %v98, 4
    %v100 = vadd.f32 %v98, %v99
    %v101 = vrot.slane %v100, 2
    %v102 = vadd.f32 %v100, %v101
    %v103 = vrot.slane %v102, 1
    %v104 = vadd.f32 %v102, %v103
    %v105 = vsel %vm90, %v89, 0.0
    %v106 = vrot.slane %v105, 4
    %v107 = vadd.f32 %v105, %v106
    %v108 = vrot.slane %v107, 2
    %v109 = vadd.f32 %v107, %v108
    %v110 = vrot.slane %v109, 1
    %v111 = vadd.f32 %v109, %v110
    %v112 = vcvt.s32.f32 %v37
    %v113 = vmax.f32 %v112, 1e-09
    %115 = vset.pattern.permute.xlu0 0
    %116 = vperm.xlu0 %115, %v113
    %v117 = vpop.permute.xlu0 %116
    %v118 = vrot.slane %v117, 1
    %v119 = vrot.slane %v117, 2
    %v123 = vrcp.pop %v117
    %v124 = vmul.f32 %v97, %v123
    %v125 = vrcp.pop %v118
    %v126 = vmul.f32 %v104, %v125
    %v127 = vrcp.pop %v119
    %v128 = vmul.f32 %v111, %v127
    %v129 = vld [vmem:[#allocation2] sm:$0xff]
    %v130 = vld [vmem:[#allocation2 + $0x8] sm:$0xff]
    %v131 = vld [vmem:[#allocation2 + $0x10] sm:$0xff]
    %v132 = vld [vmem:[#allocation2 + $0x18] sm:$0xff]
    %v133 = vld [vmem:[%s3] sm:$0x1]
    %v135 = vlaneseq
    %v136 = vshrl.u32 %v135, 7
    %v137 = vsub.s32 0, %v136
    %v138 = vrot.slane %v133, %v137
    %v143 = vrot.slane %v126, 7
    %vm144 = vcmask 1041409
    %v145 = vsel %vm144, %v143, %v124
    %v146 = vrot.slane %v128, 6
    %vm147 = vcmask 1042434
    %v148 = vsel %vm147, %v146, %v145
    %v149 = vsel %vm90, %v148, 0
    %151 = vmatprep.subr.mxu0 0.0
    %152 = vmatpush1.msra.mxu0 %v129
    %153 = vmatprep.subr.mxu0 0.0
    %154 = vmatpush1.msra.mxu0 %v130
    %155 = vmatprep.subr.mxu0 0.0
    %156 = vmatpush1.msra.mxu0 %v131
    %157 = vmatprep.subr.mxu0 0.0
    %158 = vmatpush1.msra.mxu0 %v132
    %159 = vmatprep.subr.mxu0 0.0
    %160 = vmatpush1.msra.mxu0 0.0
    %161 = vmatprep.subr.mxu0 0.0
    %162 = vmatpush1.msra.mxu0 0.0
    %163 = vmatprep.subr.mxu0 0.0
    %164 = vmatpush1.msra.mxu0 0.0
    %165 = vmatprep.subr.mxu0 0.0
    %166 = vmatpush1.msra.mxu0 0.0
    %167 = vmatprep.subr.mxu0 0.0
    %168 = vmatpush1.msra.mxu0 0.0
    %169 = vmatprep.subr.mxu0 0.0
    %170 = vmatpush1.msra.mxu0 0.0
    %171 = vmatprep.subr.mxu0 0.0
    %172 = vmatpush1.msra.mxu0 0.0
    %173 = vmatprep.subr.mxu0 0.0
    %174 = vmatpush1.msra.mxu0 0.0
    %175 = vmatprep.subr.mxu0 0.0
    %176 = vmatpush1.msra.mxu0 0.0
    %177 = vmatprep.subr.mxu0 0.0
    %178 = vmatpush1.msra.mxu0 0.0
    %179 = vmatprep.subr.mxu0 0.0
    %180 = vmatpush1.msra.mxu0 0.0
    %181 = vmatprep.subr.mxu0 0.0
    %182 = vmatpush1.msra.mxu0 0.0
    %183 = vmatprep.subr.mxu0 0.0
    %184 = vmatpush1.msra.mxu0 0.0
    %185 = vmatprep.subr.mxu0 0.0
    %186 = vmatpush1.msra.mxu0 0.0
    %187 = vmatprep.subr.mxu0 0.0
    %188 = vmatpush1.msra.mxu0 0.0
    %189 = vmatprep.subr.mxu0 0.0
    %190 = vmatpush1.msra.mxu0 0.0
    %191 = vmatprep.subr.mxu0 0.0
    %192 = vmatpush1.msra.mxu0 0.0
    %193 = vmatprep.subr.mxu0 0.0
    %194 = vmatpush1.msra.mxu0 0.0
    %195 = vmatprep.subr.mxu0 0.0
    %196 = vmatpush1.msra.mxu0 0.0
    %197 = vmatprep.subr.mxu0 0.0
    %198 = vmatpush1.msra.mxu0 0.0
    %199 = vmatprep.subr.mxu0 0.0
    %200 = vmatpush1.msra.mxu0 0.0
    %201 = vmatprep.subr.mxu0 0.0
    %202 = vmatpush1.msra.mxu0 0.0
    %203 = vmatprep.subr.mxu0 0.0
    %204 = vmatpush1.msra.mxu0 0.0
    %205 = vmatprep.subr.mxu0 0.0
    %206 = vmatpush1.msra.mxu0 0.0
    %207 = vmatprep.subr.mxu0 0.0
    %208 = vmatpush1.msra.mxu0 0.0
    %209 = vmatprep.subr.mxu0 0.0
    %210 = vmatpush1.msra.mxu0 0.0
    %211 = vmatprep.subr.mxu0 0.0
    %212 = vmatpush1.msra.mxu0 0.0
    %213 = vmatprep.subr.mxu0 0.0
    %214 = vmatpush1.msra.mxu0 0.0
    %215 = vmatprep.mubr.f32.mxu0 0.0
    %216 = vmatmul.mubr.f32.gmra.mrb[0].mxu0 %v149
    %v217 = vpop.f32.mrb[0].mxu0
    %v218 = vadd.f32 %v138, %v217
    %v219 = vpop.f32.mrb[0].mxu0
    %220 = vdwg.mxu0
    %v221 = vlaneseq
    %v222 = vand.u32 %v221, 127
    %vm223 = vcmp.lt.s32.totalorder %v222, 3
    %v224 = vsel %vm223, %v218, -1e+30
    %vm225 = vcmask 1042432
    %v226 = vsel %vm225, %v224, -inf
    %227 = vmax.xlane.f32.xlu0 %v226
    %v228 = vpop.xlane.xlu0 %227
    %vm229 = vcmp.ge.f32.partialorder %v224, %v228
    %v230 = vsel %vm229, %v222, 128
    %v231 = vsel %vm225, %v230, 2147483647
    %v232 = vand.u32 %v231, 65535
    %v233 = vshra.s32 %v231, 16
    %v234 = vcvt.s32.f32 %v232
    %v235 = vcvt.s32.f32 %v233
    %236 = vmin.xlane.f32.xlu0 %v235
    %v237 = vpop.xlane.xlu0 %236
    %vm238 = vcmp.eq.f32.partialorder %v235, %v237
    %v239 = vsel %vm238, %v234, inf
    %240 = vmin.xlane.f32.xlu0 %v239
    %v241 = vpop.xlane.xlu0 %240
    %v242 = vcvt.f32.s32 %v241
    %v243 = vcvt.f32.s32 %v237
    %v244 = vshll.u32 %v243, 16
    %v245 = vadd.s32 %v244, %v242
    %v246 = vsub.f32 %v224, %v228
    %v247 = vmul.f32 %v246, 1.442695
    %v248 = vpow.pop %v247
    %v249 = vsel %vm223, %v248, 0.0
    %v250 = vsel %vm225, %v249, 0.0
    %251 = vadd.xlane.f32.xlu0 %v250
    %v252 = vpop.xlane.xlu0 %251
    %v253 = vrcp.pop %v252
    %v254 = vmul.f32 %v249, %v253
    %vm255 = vcmp.ge.s32.totalorder %v222, 3
    %vm256 = vcmp.lt.s32.totalorder %v222, 6
    %vm257 = vmand %vm255, %vm256
    %v258 = vsel %vm257, %v218, -1e+30
    %v259 = vsel %vm225, %v258, -inf
    %260 = vmax.xlane.f32.xlu0 %v259
    %v261 = vpop.xlane.xlu0 %260
    %vm262 = vcmp.ge.f32.partialorder %v258, %v261
    %v263 = vsel %vm262, %v222, 128
    %v264 = vsel %vm225, %v263, 2147483647
    %v265 = vand.u32 %v264, 65535
    %v266 = vshra.s32 %v264, 16
    %v267 = vcvt.s32.f32 %v265
    %v268 = vcvt.s32.f32 %v266
    %269 = vmin.xlane.f32.xlu0 %v268
    %v270 = vpop.xlane.xlu0 %269
    %vm271 = vcmp.eq.f32.partialorder %v268, %v270
    %v272 = vsel %vm271, %v267, inf
    %273 = vmin.xlane.f32.xlu0 %v272
    %v274 = vpop.xlane.xlu0 %273
    %v275 = vcvt.f32.s32 %v274
    %v276 = vcvt.f32.s32 %v270
    %v277 = vshll.u32 %v276, 16
    %v278 = vadd.s32 %v277, %v275
    %v279 = vsub.f32 %v258, %v261
    %v280 = vmul.f32 %v279, 1.442695
    %v281 = vpow.pop %v280
    %v282 = vsel %vm257, %v281, 0.0
    %v283 = vsel %vm225, %v282, 0.0
    %284 = vadd.xlane.f32.xlu0 %v283
    %v285 = vpop.xlane.xlu0 %284
    %v286 = vrcp.pop %v285
    %v287 = vmul.f32 %v282, %v286
    %v288 = vsub.s32 %v278, 3
    %v289 = vadd.f32 %v254, %v287
    %vm290 = vcmp.eq.s32.totalorder %v222, 126
    %v291 = vcvt.s32.f32 %v245
    %v292 = vsel %vm290, %v291, %v289
    %vm293 = vcmp.eq.s32.totalorder %v222, 127
    %v294 = vcvt.s32.f32 %v288
    %v295 = vsel %vm293, %v294, %v292
    %296 = vst [vmem:[%s4] sm:$0x7] %v295
    // Predicated region
    $region22: #{fused_multitask_heads.1} parent=1 // pred_check
      _
    $region23: #{fused_multitask_heads.1} parent=1 // pred_check_branch
      %298 = sbr.rel (0) target = $region25
    $region24: #{fused_multitask_heads.1} parent=1 // pred_region
      _
    $region25: #{fused_multitask_heads.1} parent=1 // pred_fallthru
      _
    // Predicated region
    $region26: #{fused_multitask_heads.1} parent=1 // pred_check
      _
    $region27: #{fused_multitask_heads.1} parent=1 // pred_check_branch
      %300 = sbr.rel (0) target = $region29
    $region28: #{fused_multitask_heads.1} parent=1 // pred_region
      _
    $region29: #{fused_multitask_heads.1} parent=1 // pred_fallthru
      _
    %301 = vsyncpa [#allocation3], 1

</llo_original>
